<compile_context>
chip_gen: v7x
topology: tpu7x:2x2x1
jax: 0.10.0
libtpu: 0.0.40
codegen_flags: <defaults>
</compile_context>

<pallas_src>
from typing import NamedTuple

import jax
import jax.numpy as jnp
from jax import lax
from jax.experimental import pallas as pl
from jax.experimental.pallas import tpu as pltpu


# ---------- small vector helpers (operate on tuples of (TR, 128) tiles) ----------
def _sub(u, v):
    return tuple(a - b for a, b in zip(u, v))


def _dot3(u, v):
    return u[0] * v[0] + u[1] * v[1] + u[2] * v[2]


def _cross3(u, v):
    return (u[1] * v[2] - u[2] * v[1],
            u[2] * v[0] - u[0] * v[2],
            u[0] * v[1] - u[1] * v[0])


class _FeatureSpec(NamedTuple):
    type_id: int
    use_angle_value: bool
    atom_rows: tuple   # base row (3*pos) of each atom in the transposed input
    out_off: int       # first output row of this feature in the kernel output
    kd: int            # kernel-output rows (dihedral always 2: cos, sin)
    d: int             # final output width


# ----------------------------- Pallas kernel ----------------------------------
def _build_kernel(specs):
    """Kernel closed over the static feature configuration (no learnable params)."""

    def kernel(x_ref, o_ref):
        # x_ref: (n_cols, TR, 128), o_ref: (n_kout, TR, 128): samples dense on lanes.
        def atom(base):
            return tuple(x_ref[base + c, :, :] for c in range(3))

        cache = {}   # static CSE over duplicated (type_id, atoms) specs
        for s in specs:
            key = (s.type_id, s.atom_rows)

            if s.type_id == 0:       # angle -> cos(angle)
                if key not in cache:
                    a0, a1, a2 = (atom(b) for b in s.atom_rows)
                    r21 = _sub(a0, a1)
                    r23 = _sub(a2, a1)
                    cache[key] = (_dot3(r21, r23)
                                  * lax.rsqrt(_dot3(r21, r21))
                                  * lax.rsqrt(_dot3(r23, r23)))
                o_ref[s.out_off, :, :] = cache[key]

            elif s.type_id == 1:     # bond length
                if key not in cache:
                    a0, a1 = (atom(b) for b in s.atom_rows)
                    r12 = _sub(a1, a0)
                    cache[key] = jnp.sqrt(_dot3(r12, r12))
                o_ref[s.out_off, :, :] = cache[key]

            elif s.type_id == 2:     # dihedral -> (cos, sin)
                if key not in cache:
                    a0, a1, a2, a3 = (atom(b) for b in s.atom_rows)
                    r12 = _sub(a1, a0)
                    r23 = _sub(a2, a1)
                    r34 = _sub(a3, a2)
                    n1 = _cross3(r12, r23)
                    n2 = _cross3(r23, r34)
                    cos_phi = _dot3(n1, n2)
                    sin_phi = _dot3(n1, r34) * jnp.sqrt(_dot3(r23, r23))
                    cache[key] = (cos_phi, sin_phi)
                cos_phi, sin_phi = cache[key]
                if s.use_angle_value:
                    # Raw (cos, sin); the wrapper applies atan2 (scale-invariant),
                    # matching torch.atan2(sin_phi, cos_phi) exactly.
                    o_ref[s.out_off, :, :] = cos_phi
                    o_ref[s.out_off + 1, :, :] = sin_phi
                else:
                    # TODO(synk): radius can be 0 for degenerate (collinear) geometry,
                    # matching the torch module's divide-by-zero behaviour.
                    inv_r = lax.rsqrt(cos_phi * cos_phi + sin_phi * sin_phi)
                    o_ref[s.out_off, :, :] = cos_phi * inv_r
                    o_ref[s.out_off + 1, :, :] = sin_phi * inv_r

            elif s.type_id == 3:     # position: dense full-lane row copies
                for j, base in enumerate(s.atom_rows):
                    for c in range(3):
                        o_ref[s.out_off + 3 * j + c, :, :] = x_ref[base + c, :, :]

    return kernel


# ------------------------------ wrappers ---------------------------------------
def _round_up(a, b):
    return (a + b - 1) // b * b


def feature_layer_forward(x, configs, *, block_rows=1024):
    """Fused Pallas evaluation of a list of FeatureMap configs.

    x: [l, n_inp, 3] float array.
    configs: sequence of dicts with keys type_id, use_angle_value, local_idx.
    Returns [l, sum_of_dims] float32 (column order follows `configs`).
    """
    assert x.ndim == 3 and x.shape[2] == 3, "x must be [l, n_inp, 3]"
    l, n_inp, _ = x.shape

    # ---- static spec construction: dedup atoms, map features to input rows ----
    used = sorted({int(i) for cfg in configs for i in cfg["local_idx"]})
    if 4 * len(used) >= 3 * n_inp:
        # Gather would not shrink the input meaningfully: skip it, index x directly.
        atom_pos = {a: a for a in range(n_inp)}
        gather_idx = None
        n_atoms_in = n_inp
    else:
        atom_pos = {a: p for p, a in enumerate(used)}
        gather_idx = used
        n_atoms_in = len(used)

    specs = []
    out = 0
    for cfg in configs:
        t = int(cfg["type_id"])
        uav = bool(cfg["use_angle_value"])
        idx = tuple(int(i) for i in cfg["local_idx"])
        k = len(idx)
        kd = {0: 1, 1: 1, 2: 2, 3: 3 * k}[t]
        d = 1 if (t == 2 and uav) else kd
        specs.append(_FeatureSpec(t, uav, tuple(3 * atom_pos[i] for i in idx),
                                  out, kd, d))
        out += kd
    specs = tuple(specs)
    n_kout = out
    n_cols = 3 * n_atoms_in

    # ---- SoA / transposed input: coordinate rows, samples on lanes ------------
    xf = x.astype(jnp.float32)
    if gather_idx is None:
        xT = xf.reshape(l, 3 * n_inp).T                                   # [3*n_inp, l]
    else:
        xT = xf[:, jnp.asarray(gather_idx, jnp.int32), :].reshape(l, n_cols).T

    # Lane tiling: samples grouped into 128-lane blocks; TR blocks per grid step.
    # TR must be a multiple of 8 when the grid has >1 step (sublane constraint),
    # otherwise it equals the full (padded) extent.
    n_lb = -(-l // 128)
    tr_target = max(8, _round_up(max(block_rows, 128) // 128, 8))
    if n_lb <= tr_target:
        tr, n_lb_pad = n_lb, n_lb
    else:
        tr = tr_target
        n_lb_pad = _round_up(n_lb, tr)
    l_pad = 128 * n_lb_pad
    if l_pad != l:
        # Edge-replicate so padded samples stay finite (no rsqrt(0) -> Inf/NaN).
        xT = jnp.pad(xT, ((0, 0), (0, l_pad - l)), mode="edge")
    x3 = xT.reshape(n_cols, n_lb_pad, 128)

    yT = pl.pallas_call(
        _build_kernel(specs),
        out_shape=jax.ShapeDtypeStruct((n_kout, n_lb_pad, 128), jnp.float32),
        grid=(n_lb_pad // tr,),
        in_specs=[pl.BlockSpec((n_cols, tr, 128), lambda i: (0, i, 0))],
        out_specs=pl.BlockSpec((n_kout, tr, 128), lambda i: (0, i, 0)),
        compiler_params=pltpu.CompilerParams(
            dimension_semantics=("parallel",)),
    )(x3).reshape(n_kout, l_pad)

    # ---- tiny epilogue in the transposed domain (touch only affected rows) ----
    out_rows = []
    for s in specs:
        if s.type_id == 0 and s.use_angle_value:
            # clamp: f32 rounding can push cos slightly outside [-1, 1]
            yT = yT.at[s.out_off].set(
                jnp.arccos(jnp.clip(yT[s.out_off], -1.0, 1.0)))
            out_rows.append(s.out_off)
        elif s.type_id == 2 and s.use_angle_value:
            yT = yT.at[s.out_off].set(
                jnp.arctan2(yT[s.out_off + 1], yT[s.out_off]))
            out_rows.append(s.out_off)
        else:
            out_rows.extend(range(s.out_off, s.out_off + s.kd))
    if out_rows != list(range(n_kout)):
        yT = yT[jnp.asarray(out_rows, jnp.int32), :]
    return yT[:, :l].T


def feature_map_forward(x, *, type_id, use_angle_value, local_idx, block_rows=1024):
    """Pallas implementation of a single FeatureMap.forward. Returns [l, d]."""
    cfg = dict(type_id=type_id, use_angle_value=use_angle_value, local_idx=local_idx)
    return feature_layer_forward(x, [cfg], block_rows=block_rows)


# ----------------------------- JAX reference -----------------------------------
def feature_map_reference(x, *, type_id, use_angle_value, local_idx):
    idx = list(local_idx)
    if type_id == 0:
        r21 = x[:, idx[0], :] - x[:, idx[1], :]
        r23 = x[:, idx[2], :] - x[:, idx[1], :]
        r21l = jnp.linalg.norm(r21, axis=1, keepdims=True)
        r23l = jnp.linalg.norm(r23, axis=1, keepdims=True)
        cos_angle = jnp.sum(r21 * r23, axis=1, keepdims=True) / (r21l * r23l)
        if use_angle_value:
            return jnp.arccos(jnp.clip(cos_angle, -1.0, 1.0))
        return cos_angle
    if type_id == 1:
        r12 = x[:, idx[1], :] - x[:, idx[0], :]
        return jnp.linalg.norm(r12, axis=1, keepdims=True)
    if type_id == 2:
        r12 = x[:, idx[1], :] - x[:, idx[0], :]
        r23 = x[:, idx[2], :] - x[:, idx[1], :]
        r34 = x[:, idx[3], :] - x[:, idx[2], :]
        n1 = jnp.cross(r12, r23)
        n2 = jnp.cross(r23, r34)
        cos_phi = jnp.sum(n1 * n2, axis=1, keepdims=True)
        sin_phi = jnp.sum(n1 * r34, axis=1, keepdims=True) * \
            jnp.linalg.norm(r23, axis=1, keepdims=True)
        if use_angle_value:
            return jnp.arctan2(sin_phi, cos_phi)
        radius = jnp.sqrt(cos_phi ** 2 + sin_phi ** 2)
        return jnp.concatenate([cos_phi / radius, sin_phi / radius], axis=1)
    if type_id == 3:
        return x[:, jnp.asarray(idx), :].reshape(-1, 3 * len(idx))
    raise ValueError(f"unknown type_id {type_id}")


# ------------------------------------ main --------------------------------------
if __name__ == "__main__":
    key = jax.random.PRNGKey(0)

    configs = [
        dict(type_id=2, use_angle_value=False, local_idx=(0, 2, 1, 3)),  # dihedral [cos,sin]
        dict(type_id=2, use_angle_value=True,  local_idx=(0, 2, 1, 3)),  # dihedral angle
        dict(type_id=1, use_angle_value=False, local_idx=(0, 4)),        # bond length
        dict(type_id=0, use_angle_value=False, local_idx=(0, 1, 2)),     # angle cos
        dict(type_id=0, use_angle_value=True,  local_idx=(0, 1, 2)),     # angle value
        dict(type_id=3, use_angle_value=False, local_idx=(1, 3, 4)),     # positions
    ]

    def tol_for(cfg):
        # arccos is ill-conditioned near |cos| = 1; loosen only for that path.
        return 5e-3 if (cfg["type_id"] == 0 and cfg["use_angle_value"]) else 1e-4

    # Cases: single tiny tile; multi-block grid with a padded tail; and a wide
    # molecule where the unique-atom gather actually shrinks the input.
    cases = [(8, 5, 1024), (1100, 5, 128), (64, 40, 1024)]
    for l, n_inp, block_rows in cases:
        x = jax.random.normal(jax.random.fold_in(key, l), (l, n_inp, 3),
                              dtype=jnp.float32)

        # Per-feature kernels.
        for cfg in configs:
            out = jax.block_until_ready(
                feature_map_forward(x, block_rows=block_rows, **cfg))
            ref = feature_map_reference(x, **cfg)
            assert out.shape == ref.shape, (cfg, out.shape, ref.shape)
            assert jnp.allclose(out, ref, atol=tol_for(cfg), rtol=1e-4), \
                f"mismatch for config {cfg} (l={l}, n_inp={n_inp})"

        # Fused feature layer: one pallas_call, one wide [l, D_total] output.
        fused = jax.block_until_ready(
            feature_layer_forward(x, configs, block_rows=block_rows))
        refs = [feature_map_reference(x, **c) for c in configs]
        ref_all = jnp.concatenate(refs, axis=1)
        assert fused.shape == ref_all.shape, (fused.shape, ref_all.shape)
        col = 0
        for cfg, r in zip(configs, refs):
            d = r.shape[1]
            assert jnp.allclose(fused[:, col:col + d], r,
                                atol=tol_for(cfg), rtol=1e-4), \
                f"fused mismatch for {cfg} (l={l}, n_inp={n_inp})"
            col += d

    print("KERNEL_OK")
</pallas_src>

<mosaic_0001>
module attributes {stable_mosaic.version = 11 : i64} {
  func.func @kernel(%arg0: i32, %arg1: memref<15x1x128xf32, #tpu.memory_space<vmem>>, %arg2: memref<2x1x128xf32, #tpu.memory_space<vmem>>) attributes {dimension_semantics = [#tpu.dimension_semantics<parallel>], iteration_bounds = array<i64: 1>, scalar_prefetch = 0 : i64, scratch_operands = 0 : i64, tpu.core_type = #tpu.core_type<tc>, window_params = [{transform_indices = @transform_0, window_bounds = array<i64: 15, 1, 128>}, {transform_indices = @transform_1, window_bounds = array<i64: 2, 1, 128>}]} {
    %c0 = arith.constant 0 : index
    %c0_0 = arith.constant 0 : index
    %c0_1 = arith.constant 0 : index
    %0 = vector.load %arg1[%c0, %c0_0, %c0_1] : memref<15x1x128xf32, #tpu.memory_space<vmem>>, vector<1x1x128xf32>
    %1 = vector.shape_cast %0 : vector<1x1x128xf32> to vector<1x128xf32>
    %c1 = arith.constant 1 : index
    %c0_2 = arith.constant 0 : index
    %c0_3 = arith.constant 0 : index
    %2 = vector.load %arg1[%c1, %c0_2, %c0_3] : memref<15x1x128xf32, #tpu.memory_space<vmem>>, vector<1x1x128xf32>
    %3 = vector.shape_cast %2 : vector<1x1x128xf32> to vector<1x128xf32>
    %c2 = arith.constant 2 : index
    %c0_4 = arith.constant 0 : index
    %c0_5 = arith.constant 0 : index
    %4 = vector.load %arg1[%c2, %c0_4, %c0_5] : memref<15x1x128xf32, #tpu.memory_space<vmem>>, vector<1x1x128xf32>
    %5 = vector.shape_cast %4 : vector<1x1x128xf32> to vector<1x128xf32>
    %c6 = arith.constant 6 : index
    %c0_6 = arith.constant 0 : index
    %c0_7 = arith.constant 0 : index
    %6 = vector.load %arg1[%c6, %c0_6, %c0_7] : memref<15x1x128xf32, #tpu.memory_space<vmem>>, vector<1x1x128xf32>
    %7 = vector.shape_cast %6 : vector<1x1x128xf32> to vector<1x128xf32>
    %c7 = arith.constant 7 : index
    %c0_8 = arith.constant 0 : index
    %c0_9 = arith.constant 0 : index
    %8 = vector.load %arg1[%c7, %c0_8, %c0_9] : memref<15x1x128xf32, #tpu.memory_space<vmem>>, vector<1x1x128xf32>
    %9 = vector.shape_cast %8 : vector<1x1x128xf32> to vector<1x128xf32>
    %c8 = arith.constant 8 : index
    %c0_10 = arith.constant 0 : index
    %c0_11 = arith.constant 0 : index
    %10 = vector.load %arg1[%c8, %c0_10, %c0_11] : memref<15x1x128xf32, #tpu.memory_space<vmem>>, vector<1x1x128xf32>
    %11 = vector.shape_cast %10 : vector<1x1x128xf32> to vector<1x128xf32>
    %c3 = arith.constant 3 : index
    %c0_12 = arith.constant 0 : index
    %c0_13 = arith.constant 0 : index
    %12 = vector.load %arg1[%c3, %c0_12, %c0_13] : memref<15x1x128xf32, #tpu.memory_space<vmem>>, vector<1x1x128xf32>
    %13 = vector.shape_cast %12 : vector<1x1x128xf32> to vector<1x128xf32>
    %c4 = arith.constant 4 : index
    %c0_14 = arith.constant 0 : index
    %c0_15 = arith.constant 0 : index
    %14 = vector.load %arg1[%c4, %c0_14, %c0_15] : memref<15x1x128xf32, #tpu.memory_space<vmem>>, vector<1x1x128xf32>
    %15 = vector.shape_cast %14 : vector<1x1x128xf32> to vector<1x128xf32>
    %c5 = arith.constant 5 : index
    %c0_16 = arith.constant 0 : index
    %c0_17 = arith.constant 0 : index
    %16 = vector.load %arg1[%c5, %c0_16, %c0_17] : memref<15x1x128xf32, #tpu.memory_space<vmem>>, vector<1x1x128xf32>
    %17 = vector.shape_cast %16 : vector<1x1x128xf32> to vector<1x128xf32>
    %c9 = arith.constant 9 : index
    %c0_18 = arith.constant 0 : index
    %c0_19 = arith.constant 0 : index
    %18 = vector.load %arg1[%c9, %c0_18, %c0_19] : memref<15x1x128xf32, #tpu.memory_space<vmem>>, vector<1x1x128xf32>
    %19 = vector.shape_cast %18 : vector<1x1x128xf32> to vector<1x128xf32>
    %c10 = arith.constant 10 : index
    %c0_20 = arith.constant 0 : index
    %c0_21 = arith.constant 0 : index
    %20 = vector.load %arg1[%c10, %c0_20, %c0_21] : memref<15x1x128xf32, #tpu.memory_space<vmem>>, vector<1x1x128xf32>
    %21 = vector.shape_cast %20 : vector<1x1x128xf32> to vector<1x128xf32>
    %c11 = arith.constant 11 : index
    %c0_22 = arith.constant 0 : index
    %c0_23 = arith.constant 0 : index
    %22 = vector.load %arg1[%c11, %c0_22, %c0_23] : memref<15x1x128xf32, #tpu.memory_space<vmem>>, vector<1x1x128xf32>
    %23 = vector.shape_cast %22 : vector<1x1x128xf32> to vector<1x128xf32>
    %24 = arith.subf %7, %1 : vector<1x128xf32>
    %25 = arith.subf %9, %3 : vector<1x128xf32>
    %26 = arith.subf %11, %5 : vector<1x128xf32>
    %27 = arith.subf %13, %7 : vector<1x128xf32>
    %28 = arith.subf %15, %9 : vector<1x128xf32>
    %29 = arith.subf %17, %11 : vector<1x128xf32>
    %30 = arith.subf %19, %13 : vector<1x128xf32>
    %31 = arith.subf %21, %15 : vector<1x128xf32>
    %32 = arith.subf %23, %17 : vector<1x128xf32>
    %33 = arith.mulf %25, %29 : vector<1x128xf32>
    %34 = arith.mulf %26, %28 : vector<1x128xf32>
    %35 = arith.subf %33, %34 : vector<1x128xf32>
    %36 = arith.mulf %26, %27 : vector<1x128xf32>
    %37 = arith.mulf %24, %29 : vector<1x128xf32>
    %38 = arith.subf %36, %37 : vector<1x128xf32>
    %39 = arith.mulf %24, %28 : vector<1x128xf32>
    %40 = arith.mulf %25, %27 : vector<1x128xf32>
    %41 = arith.subf %39, %40 : vector<1x128xf32>
    %42 = arith.mulf %28, %32 : vector<1x128xf32>
    %43 = arith.mulf %29, %31 : vector<1x128xf32>
    %44 = arith.subf %42, %43 : vector<1x128xf32>
    %45 = arith.mulf %29, %30 : vector<1x128xf32>
    %46 = arith.mulf %27, %32 : vector<1x128xf32>
    %47 = arith.subf %45, %46 : vector<1x128xf32>
    %48 = arith.mulf %27, %31 : vector<1x128xf32>
    %49 = arith.mulf %28, %30 : vector<1x128xf32>
    %50 = arith.subf %48, %49 : vector<1x128xf32>
    %51 = arith.mulf %35, %44 : vector<1x128xf32>
    %52 = arith.mulf %38, %47 : vector<1x128xf32>
    %53 = arith.addf %51, %52 : vector<1x128xf32>
    %54 = arith.mulf %41, %50 : vector<1x128xf32>
    %55 = arith.addf %53, %54 : vector<1x128xf32>
    %56 = arith.mulf %35, %30 : vector<1x128xf32>
    %57 = arith.mulf %38, %31 : vector<1x128xf32>
    %58 = arith.addf %56, %57 : vector<1x128xf32>
    %59 = arith.mulf %41, %32 : vector<1x128xf32>
    %60 = arith.addf %58, %59 : vector<1x128xf32>
    %61 = arith.mulf %27, %27 : vector<1x128xf32>
    %62 = arith.mulf %28, %28 : vector<1x128xf32>
    %63 = arith.addf %61, %62 : vector<1x128xf32>
    %64 = arith.mulf %29, %29 : vector<1x128xf32>
    %65 = arith.addf %63, %64 : vector<1x128xf32>
    %66 = math.sqrt %65 : vector<1x128xf32>
    %67 = arith.mulf %60, %66 : vector<1x128xf32>
    %68 = arith.mulf %55, %55 : vector<1x128xf32>
    %69 = arith.mulf %67, %67 : vector<1x128xf32>
    %70 = arith.addf %68, %69 : vector<1x128xf32>
    %71 = math.rsqrt %70 : vector<1x128xf32>
    %72 = arith.mulf %55, %71 : vector<1x128xf32>
    %c0_24 = arith.constant 0 : index
    %c0_25 = arith.constant 0 : index
    %c0_26 = arith.constant 0 : index
    %73 = vector.load %arg2[%c0_24, %c0_25, %c0_26] : memref<2x1x128xf32, #tpu.memory_space<vmem>>, vector<1x1x128xf32>
    %74 = vector.shape_cast %73 : vector<1x1x128xf32> to vector<1x128xf32>
    %75 = vector.shape_cast %72 : vector<1x128xf32> to vector<1x1x128xf32>
    tpu.vector_store %arg2[%c0_24, %c0_25, %c0_26], %75 {strides = array<i32>} : memref<2x1x128xf32, #tpu.memory_space<vmem>>, vector<1x1x128xf32>,
    %76 = arith.mulf %67, %71 : vector<1x128xf32>
    %c1_27 = arith.constant 1 : index
    %c0_28 = arith.constant 0 : index
    %c0_29 = arith.constant 0 : index
    %77 = vector.load %arg2[%c1_27, %c0_28, %c0_29] : memref<2x1x128xf32, #tpu.memory_space<vmem>>, vector<1x1x128xf32>
    %78 = vector.shape_cast %77 : vector<1x1x128xf32> to vector<1x128xf32>
    %79 = vector.shape_cast %76 : vector<1x128xf32> to vector<1x1x128xf32>
    tpu.vector_store %arg2[%c1_27, %c0_28, %c0_29], %79 {strides = array<i32>} : memref<2x1x128xf32, #tpu.memory_space<vmem>>, vector<1x1x128xf32>,
    return
  }
  func.func @transform_0(%arg0: i32) -> (i32, i32, i32) {
    %c0_i32 = arith.constant 0 : i32
    %c0_i32_0 = arith.constant 0 : i32
    %c0_i32_1 = arith.constant 0 : i32
    return %c0_i32, %arg0, %c0_i32_0 : i32, i32, i32
  }
  func.func @transform_1(%arg0: i32) -> (i32, i32, i32) {
    %c0_i32 = arith.constant 0 : i32
    %c0_i32_0 = arith.constant 0 : i32
    %c0_i32_1 = arith.constant 0 : i32
    return %c0_i32, %arg0, %c0_i32_0 : i32, i32, i32
  }
}

</mosaic_0001>

<llo_original>
// kernel: tpu_custom_call.1
$region0: #{tpu_custom_call.1}
  #allocation0 [shape = 'u32[]', space=smem, size = 0x4, offset = 0x4, fixed_abs, tag = 'smem constant byte address 0x4 - core index']
  #allocation1 [shape = 'u32[144,128]{1,0:T(1,128)}', space=vmem, size = 0x12000, scoped, tag = 'internal scratch']
  %s0 = inlined_call_operand.hbm [shape: f32[15,1,128], index: 0, kind: input, shape index: {}]
  %s1 = inlined_call_operand.hbm [shape: f32[2,1,128], index: 1, kind: output, shape index: {}]
  %s2 = sld [smem:[#allocation0]]
  $region18: #{tpu_custom_call.1} parent=0
    _
  %s4 = ssub.s32 1, %s2
  %s5 = scalar_select 0, %s4, %s2
  $region1: #{tpu_custom_call.1} parent=0
    #allocation2 [shape = 'u8[7680]{0}', space=vmem, size = 0x2000, scoped, tag = 'input window, operand 0, single buffered']
    #allocation3 [shape = 's32[1]{0}', space=sflag, size = 0x4, scoped, tag = 'scoped memory for tpu_custom_call.1']
    #allocation4 [shape = 's32[1]{0}', space=sflag, size = 0x4, scoped, tag = 'scoped memory for tpu_custom_call.1']
    #allocation5 [shape = 'u8[1024]{0}', space=vmem, size = 0x400, scoped, tag = 'output window, operand 0, single buffered']
    %6 = vsyncpa [#allocation3], 0
    %7 = vsyncpa [#allocation4], 0
    // Predicated region
    $region2: #{tpu_custom_call.1} parent=1 // pred_check
      _
    $region3: #{tpu_custom_call.1} parent=1 // pred_check_branch
      %9 = sbr.rel (0) target = $region5
    $region4: #{tpu_custom_call.1} parent=1 // pred_region
      %s11 = ssub.s32 240, 240
      %12 = vsyncadd [#allocation3], %s11
      %s13 = sshll.u32 [#allocation2], 4
      %s14 = int_to_ptr.vmem [resolvable:$true] %s13
      %19 = dma.hbm_to_vmem [thread:$0]  %s0, 240, %s14, [#allocation3], 16, 16, 1
    $region5: #{tpu_custom_call.1} parent=1 // pred_fallthru
      _
    // Predicated region
    $region6: #{tpu_custom_call.1} parent=1 // pred_check
      _
    $region7: #{tpu_custom_call.1} parent=1 // pred_check_branch
      %21 = sbr.rel (0) target = $region9
    $region8: #{tpu_custom_call.1} parent=1 // pred_region
      %22 = dma.done [#allocation3], 240
    $region9: #{tpu_custom_call.1} parent=1 // pred_fallthru
      _
    %v23 = vld [vmem:[#allocation2] sm:$0x1]
    %s24 = scalar_lea.vmem [#allocation2], 1
    %v25 = vld [vmem:[%s24] sm:$0x1]
    %s26 = scalar_lea.vmem [#allocation2], 2
    %v27 = vld [vmem:[%s26] sm:$0x1]
    %s28 = scalar_lea.vmem [#allocation2], 6
    %v29 = vld [vmem:[%s28] sm:$0x1]
    %s30 = scalar_lea.vmem [#allocation2], 7
    %v31 = vld [vmem:[%s30] sm:$0x1]
    %s32 = scalar_lea.vmem [#allocation2], 8
    %v33 = vld [vmem:[%s32] sm:$0x1]
    %s34 = scalar_lea.vmem [#allocation2], 3
    %v35 = vld [vmem:[%s34] sm:$0x1]
    %s36 = scalar_lea.vmem [#allocation2], 4
    %v37 = vld [vmem:[%s36] sm:$0x1]
    %s38 = scalar_lea.vmem [#allocation2], 5
    %v39 = vld [vmem:[%s38] sm:$0x1]
    %s40 = scalar_lea.vmem [#allocation2], 9
    %v41 = vld [vmem:[%s40] sm:$0x1]
    %s42 = scalar_lea.vmem [#allocation2], 10
    %v43 = vld [vmem:[%s42] sm:$0x1]
    %s44 = scalar_lea.vmem [#allocation2], 11
    %v45 = vld [vmem:[%s44] sm:$0x1]
    %v46 = vsub.f32 %v29, %v23
    %v47 = vsub.f32 %v31, %v25
    %v48 = vsub.f32 %v33, %v27
    %v49 = vsub.f32 %v35, %v29
    %v50 = vsub.f32 %v37, %v31
    %v51 = vsub.f32 %v39, %v33
    %v52 = vsub.f32 %v41, %v35
    %v53 = vsub.f32 %v43, %v37
    %v54 = vsub.f32 %v45, %v39
    %v55 = vmul.f32 %v47, %v51
    %v56 = vmul.f32 %v48, %v50
    %v57 = vsub.f32 %v55, %v56
    %v58 = vmul.f32 %v48, %v49
    %v59 = vmul.f32 %v46, %v51
    %v60 = vsub.f32 %v58, %v59
    %v61 = vmul.f32 %v46, %v50
    %v62 = vmul.f32 %v47, %v49
    %v63 = vsub.f32 %v61, %v62
    %v64 = vmul.f32 %v50, %v54
    %v65 = vmul.f32 %v51, %v53
    %v66 = vsub.f32 %v64, %v65
    %v67 = vmul.f32 %v51, %v52
    %v68 = vmul.f32 %v49, %v54
    %v69 = vsub.f32 %v67, %v68
    %v70 = vmul.f32 %v49, %v53
    %v71 = vmul.f32 %v50, %v52
    %v72 = vsub.f32 %v70, %v71
    %v73 = vmul.f32 %v57, %v66
    %v74 = vmul.f32 %v60, %v69
    %v75 = vadd.f32 %v73, %v74
    %v76 = vmul.f32 %v63, %v72
    %v77 = vadd.f32 %v75, %v76
    %v78 = vmul.f32 %v57, %v52
    %v79 = vmul.f32 %v60, %v53
    %v80 = vadd.f32 %v78, %v79
    %v81 = vmul.f32 %v63, %v54
    %v82 = vadd.f32 %v80, %v81
    %v83 = vmul.f32 %v49, %v49
    %v84 = vmul.f32 %v50, %v50
    %v85 = vadd.f32 %v83, %v84
    %v86 = vmul.f32 %v51, %v51
    %v87 = vadd.f32 %v85, %v86
    %v88 = vrsqrt.pop %v87
    %v89 = vmul.f32 %v87, %v88
    %vm90 = vcmp.eq.f32.partialorder %v87, inf
    %v91 = vsel %vm90, %v87, %v89
    %vm92 = vcmp.eq.f32.partialorder %v87, 0.0
    %v93 = vand.u32 %v87, 2147483648
    %v94 = vsel %vm92, %v93, %v91
    %v95 = vmul.f32 %v82, %v94
    %v96 = vmul.f32 %v77, %v77
    %v97 = vmul.f32 %v95, %v95
    %v98 = vadd.f32 %v96, %v97
    %v99 = vrsqrt.pop %v98
    %v100 = vmul.f32 %v77, %v99
    %101 = vst [vmem:[#allocation5] sm:$0x1] %v100
    %v102 = vmul.f32 %v95, %v99
    %s103 = scalar_lea.vmem [#allocation5], 1
    %104 = vst [vmem:[%s103] sm:$0x1] %v102
    // Predicated region
    $region10: #{tpu_custom_call.1} parent=1 // pred_check
      _
    $region11: #{tpu_custom_call.1} parent=1 // pred_check_branch
      %106 = sbr.rel (0) target = $region13
    $region12: #{tpu_custom_call.1} parent=1 // pred_region
      %s108 = ssub.s32 32, 32
      %109 = vsyncadd [#allocation4], %s108
      %s110 = sshll.u32 [#allocation5], 4
      %s111 = int_to_ptr.vmem [resolvable:$true] %s110
      %116 = dma.vmem_to_hbm [thread:$0]  %s111, 32, %s1, [#allocation4], 16, 16, 1
    $region13: #{tpu_custom_call.1} parent=1 // pred_fallthru
      _
    // Predicated region
    $region14: #{tpu_custom_call.1} parent=1 // pred_check
      _
    $region15: #{tpu_custom_call.1} parent=1 // pred_check_branch
      %118 = sbr.rel (0) target = $region17
    $region16: #{tpu_custom_call.1} parent=1 // pred_region
      %119 = dma.done [#allocation4], 32
    $region17: #{tpu_custom_call.1} parent=1 // pred_fallthru
      _
    %120 = vsyncpa [#allocation3], 1
    %121 = vsyncpa [#allocation4], 1

</llo_original>
